<compile_context>
chip_gen: v6e
topology: v6e:2x2x1
jax: 0.10.0
libtpu: 0.0.40
codegen_flags: <defaults>
</compile_context>

<pallas_src>
import functools

import jax
import jax.numpy as jnp
from jax import lax
from jax.experimental import pallas as pl
from jax.experimental.pallas import tpu as pltpu


def _round_up(a, m):
    return ((a + m - 1) // m) * m


def _wn_conv_kernel(patches_ref, vt_ref, g_ref, b_ref, o_ref, *, eps):
    # vt_ref: (Kp, Cp) = weight_v flattened over (Cin, KH, KW) and transposed.
    vt = vt_ref[...]
    # norm_except_dim(v, 2, dim=0): L2 norm over every dim except Cout.
    # Zero-padded K rows contribute 0, so the padded reduction is exact.
    sq = jnp.sum(vt * vt, axis=0, keepdims=True)                 # (1, Cp) XLU reduce
    if eps == 0.0:
        inv = lax.rsqrt(sq)                                      # EUP; == 1/(nrm + 0)
    else:
        inv = pl.reciprocal(jnp.sqrt(sq) + eps, approx=True)     # EUP
    scale = g_ref[...] * inv                                     # (1, Cp)
    # Padded Cout columns are all-zero -> 0*inf = NaN in `scale`/`w`, but matmul
    # columns are independent, so NaN stays in padded output columns which the
    # wrapper slices off.  Real columns are unaffected.
    w = vt * scale                                               # (Kp, Cp)
    acc = jnp.dot(patches_ref[...], w, preferred_element_type=jnp.float32)
    o_ref[...] = (acc + b_ref[...]).astype(o_ref.dtype)          # (TP, Cp)


def _choose_tile_p(P, Kp, Cp, *, bytes_per_elt=4, vmem_budget=20 * 1024 * 1024):
    """Largest P-tile (multiple of 8, capped at 1024) fitting the VMEM budget."""
    resident = 2 * Kp * Cp * bytes_per_elt + 4 * Cp * bytes_per_elt
    per_row = 2 * (Kp + Cp) * bytes_per_elt        # double-buffered patches + output rows
    tp = (vmem_budget - resident) // per_row
    tp = max(8, (tp // 8) * 8)
    tp = min(tp, 1024)                              # measured sweet spot 512-1024
    tp = min(tp, _round_up(P, 8))
    return int(tp)


def weightnorm_conv2d(x, v, g, b, *, eps=0.0):
    """WeightNorm(nn.Conv2d(Cin, Cout, 3, padding=1), name='weight', dim=0, eps).

    x: (N, Cin, H, W)  NCHW
    v: (Cout, Cin, KH, KW)   ('weight_v')
    g: (Cout, 1, 1, 1)       ('weight_g')
    b: (Cout,)               conv bias
    """
    N, Cin, H, W = x.shape
    Cout, _, KH, KW = v.shape
    ph, pw = KH // 2, KW // 2
    K = Cin * KH * KW

    # ---- glue (plain JAX): im2col patch extraction; flatten order = (Cin, KH, KW)
    xp = jnp.pad(x, ((0, 0), (0, 0), (ph, ph), (pw, pw)))
    cols = jnp.stack(
        [xp[:, :, kh:kh + H, kw:kw + W] for kh in range(KH) for kw in range(KW)],
        axis=2,
    )                                                   # (N, Cin, KH*KW, H, W)
    patches = cols.reshape(N, K, H, W).transpose(0, 2, 3, 1).reshape(N * H * W, K)

    P = N * H * W
    Kp = _round_up(K, 128)      # lane-dense contraction dim
    Cp = _round_up(Cout, 128)   # lane-dense output dim -> unmasked stores
    TP = _choose_tile_p(P, Kp, Cp)
    Pp = _round_up(P, TP)
    grid_p = Pp // TP

    # Zero-pad (zeros are exact for both the matmul and the sum-of-squares norm).
    patches_p = jnp.zeros((Pp, Kp), patches.dtype).at[:P, :K].set(patches)
    vt_p = jnp.zeros((Kp, Cp), v.dtype).at[:K, :Cout].set(v.reshape(Cout, K).T)
    g_p = jnp.zeros((1, Cp), g.dtype).at[:, :Cout].set(g.reshape(1, Cout))
    b_p = jnp.zeros((1, Cp), b.dtype).at[:, :Cout].set(b.reshape(1, Cout))

    cost = pl.CostEstimate(
        flops=2 * Pp * Kp * Cp + grid_p * 2 * Kp * Cp,
        transcendentals=grid_p * Cp,
        bytes_accessed=4 * (Pp * Kp + Kp * Cp + 2 * Cp + Pp * Cp),
    )

    out_flat = pl.pallas_call(
        functools.partial(_wn_conv_kernel, eps=eps),
        out_shape=jax.ShapeDtypeStruct((Pp, Cp), x.dtype),
        grid=(grid_p,),
        in_specs=[
            pl.BlockSpec((TP, Kp), lambda i: (i, 0)),   # patches: streamed / double-buffered
            pl.BlockSpec((Kp, Cp), lambda i: (0, 0)),   # weight_v^T: VMEM-resident
            pl.BlockSpec((1, Cp), lambda i: (0, 0)),    # weight_g row: resident
            pl.BlockSpec((1, Cp), lambda i: (0, 0)),    # bias row: resident
        ],
        out_specs=pl.BlockSpec((TP, Cp), lambda i: (i, 0)),
        compiler_params=pltpu.CompilerParams(
            dimension_semantics=("parallel",),          # v7x: shard P over 2 TCs
            vmem_limit_bytes=32 * 1024 * 1024,
        ),
        cost_estimate=cost,
    )(patches_p, vt_p, g_p, b_p)

    # (Pp, Cp) -> drop padding -> (N, Cout, H, W)
    out = out_flat[:P, :Cout]
    return out.reshape(N, H, W, Cout).transpose(0, 3, 1, 2)


if __name__ == "__main__":
    key = jax.random.PRNGKey(0)
    N, Cin, Cout, H, W, KH, KW = 2, 4, 8, 16, 16, 3, 3
    kx, kv, kb = jax.random.split(key, 3)

    x = jax.random.normal(kx, (N, Cin, H, W), jnp.float32)
    # wrapped module's weight -> v ; WeightNorm._reset(): g = norm_except_dim(v, 2, 0)
    v = jax.random.normal(kv, (Cout, Cin, KH, KW), jnp.float32) * 0.1
    g = jnp.sqrt(jnp.sum(v * v, axis=(1, 2, 3), keepdims=True))     # (Cout,1,1,1)
    b = jax.random.normal(kb, (Cout,), jnp.float32) * 0.1
    eps = 0.0  # WeightNorm default

    out = weightnorm_conv2d(x, v, g, b, eps=eps)
    jax.block_until_ready(out)

    # pure-JAX reference (same math path) for sanity
    w_ref = v * g / (jnp.sqrt(jnp.sum(v * v, axis=(1, 2, 3), keepdims=True)) + eps)
    ref = jax.lax.conv_general_dilated(
        x, w_ref, window_strides=(1, 1), padding="SAME",
        dimension_numbers=("NCHW", "OIHW", "NCHW"),
    ) + b.reshape(1, Cout, 1, 1)
    assert out.shape == (N, Cout, H, W)
    assert jnp.allclose(out, ref, atol=1e-4, rtol=1e-4)

    print("KERNEL_OK")
</pallas_src>

<mosaic_0001>
module attributes {stable_mosaic.version = 11 : i64} {
  func.func @_wn_conv_kernel(%arg0: i32, %arg1: memref<512x128xf32, #tpu.memory_space<vmem>>, %arg2: memref<128x128xf32, #tpu.memory_space<vmem>>, %arg3: memref<1x128xf32, #tpu.memory_space<vmem>>, %arg4: memref<1x128xf32, #tpu.memory_space<vmem>>, %arg5: memref<512x128xf32, #tpu.memory_space<vmem>>) attributes {dimension_semantics = [#tpu.dimension_semantics<parallel>], iteration_bounds = array<i64: 1>, scalar_prefetch = 0 : i64, scratch_operands = 0 : i64, tpu.core_type = #tpu.core_type<tc>, window_params = [{transform_indices = @transform_0, window_bounds = array<i64: 512, 128>}, {pipeline_mode = #tpu.pipeline_mode<synchronous>, transform_indices = @transform_1, window_bounds = array<i64: 128, 128>}, {pipeline_mode = #tpu.pipeline_mode<synchronous>, transform_indices = @transform_2, window_bounds = array<i64: 1, 128>}, {pipeline_mode = #tpu.pipeline_mode<synchronous>, transform_indices = @transform_3, window_bounds = array<i64: 1, 128>}, {transform_indices = @transform_4, window_bounds = array<i64: 512, 128>}]} {
    %c0 = arith.constant 0 : index
    %c0_0 = arith.constant 0 : index
    %0 = vector.load %arg2[%c0, %c0_0] : memref<128x128xf32, #tpu.memory_space<vmem>>, vector<128x128xf32>
    %1 = arith.mulf %0, %0 : vector<128x128xf32>
    %cst = arith.constant dense<0.000000e+00> : vector<128xf32>
    %2 = vector.multi_reduction <add>, %1, %cst [0] : vector<128x128xf32> to vector<128xf32>
    %3 = vector.shape_cast %2 : vector<128xf32> to vector<1x128xf32>
    %4 = math.rsqrt %3 : vector<1x128xf32>
    %c0_1 = arith.constant 0 : index
    %c0_2 = arith.constant 0 : index
    %5 = vector.load %arg3[%c0_1, %c0_2] : memref<1x128xf32, #tpu.memory_space<vmem>>, vector<1x128xf32>
    %6 = arith.mulf %5, %4 : vector<1x128xf32>
    %7 = vector.broadcast %6 : vector<1x128xf32> to vector<128x128xf32>
    %8 = arith.mulf %0, %7 : vector<128x128xf32>
    %c0_3 = arith.constant 0 : index
    %c0_4 = arith.constant 0 : index
    %9 = vector.load %arg1[%c0_3, %c0_4] : memref<512x128xf32, #tpu.memory_space<vmem>>, vector<512x128xf32>
    %cst_5 = arith.constant dense<0.000000e+00> : vector<512x128xf32>
    %10 = tpu.matmul %9, %8, %cst_5 {dimension_numbers = #tpu.dot_dimension_numbers<[1], [0], [0], [1], [0, 0, 1, 1], [], []>} : vector<512x128xf32>, vector<128x128xf32>, vector<512x128xf32> -> vector<512x128xf32>
    %c0_6 = arith.constant 0 : index
    %c0_7 = arith.constant 0 : index
    %11 = vector.load %arg4[%c0_6, %c0_7] : memref<1x128xf32, #tpu.memory_space<vmem>>, vector<1x128xf32>
    %12 = vector.broadcast %11 : vector<1x128xf32> to vector<512x128xf32>
    %13 = arith.addf %10, %12 : vector<512x128xf32>
    %c0_8 = arith.constant 0 : index
    %c0_9 = arith.constant 0 : index
    %14 = vector.load %arg5[%c0_8, %c0_9] : memref<512x128xf32, #tpu.memory_space<vmem>>, vector<512x128xf32>
    tpu.vector_store %arg5[%c0_8, %c0_9], %13 {strides = array<i32>} : memref<512x128xf32, #tpu.memory_space<vmem>>, vector<512x128xf32>,
    return
  }
  func.func @transform_0(%arg0: i32) -> (i32, i32) {
    %c0_i32 = arith.constant 0 : i32
    %c0_i32_0 = arith.constant 0 : i32
    return %arg0, %c0_i32 : i32, i32
  }
  func.func @transform_1(%arg0: i32) -> (i32, i32) {
    %c0_i32 = arith.constant 0 : i32
    %c0_i32_0 = arith.constant 0 : i32
    %c0_i32_1 = arith.constant 0 : i32
    return %c0_i32, %c0_i32_0 : i32, i32
  }
  func.func @transform_2(%arg0: i32) -> (i32, i32) {
    %c0_i32 = arith.constant 0 : i32
    %c0_i32_0 = arith.constant 0 : i32
    %c0_i32_1 = arith.constant 0 : i32
    return %c0_i32, %c0_i32_0 : i32, i32
  }
  func.func @transform_3(%arg0: i32) -> (i32, i32) {
    %c0_i32 = arith.constant 0 : i32
    %c0_i32_0 = arith.constant 0 : i32
    %c0_i32_1 = arith.constant 0 : i32
    return %c0_i32, %c0_i32_0 : i32, i32
  }
  func.func @transform_4(%arg0: i32) -> (i32, i32) {
    %c0_i32 = arith.constant 0 : i32
    %c0_i32_0 = arith.constant 0 : i32
    return %arg0, %c0_i32 : i32, i32
  }
}

</mosaic_0001>

<llo_original>
// kernel: tpu_custom_call.1
$region0: #{tpu_custom_call.1}
  #allocation0 [shape = 'u32[]', space=smem, size = 0x4, offset = 0x4, fixed_abs, tag = 'smem constant byte address 0x4 - core index']
  #allocation1 [shape = 'u32[144,128]{1,0:T(1,128)}', space=vmem, size = 0x12000, scoped, tag = 'internal scratch']
  %s0 = inlined_call_operand.hbm [shape: f32[512,128], index: 0, kind: input, shape index: {}]
  %s1 = inlined_call_operand.hbm [shape: f32[128,128], index: 1, kind: input, shape index: {}]
  %s2 = inlined_call_operand.vmem [shape: f32[1,128], index: 2, kind: input, shape index: {}]
  %s3 = inlined_call_operand.vmem [shape: f32[1,128], index: 3, kind: input, shape index: {}]
  %s4 = inlined_call_operand.hbm [shape: f32[512,128], index: 4, kind: output, shape index: {}]
  %s5 = sld [smem:[#allocation0]]
  $region34: #{tpu_custom_call.1} parent=0
    _
  %s7 = ssub.s32 1, %s5
  %s8 = scalar_select 0, %s7, %s5
  $region1: #{tpu_custom_call.1} parent=0
    #allocation2 [shape = 'u8[262144]{0}', space=vmem, size = 0x40000, scoped, tag = 'input window, operand 0, single buffered']
    #allocation3 [shape = 's32[1]{0}', space=sflag, size = 0x4, scoped, tag = 'scoped memory for tpu_custom_call.1']
    #allocation4 [shape = 's32[1]{0}', space=sflag, size = 0x4, scoped, tag = 'scoped memory for tpu_custom_call.1']
    #allocation5 [shape = 'u8[65536]{0}', space=vmem, size = 0x10000, scoped, tag = 'input window, operand 1, single buffered']
    #allocation6 [shape = 's32[1]{0}', space=sflag, size = 0x4, scoped, tag = 'scoped memory for tpu_custom_call.1']
    #allocation7 [shape = 'u8[262144]{0}', space=vmem, size = 0x40000, scoped, tag = 'output window, operand 0, single buffered']
    %9 = vsyncpa [#allocation3], 0
    %10 = vsyncpa [#allocation6], 0
    %11 = vsyncpa [#allocation4], 0
    // Predicated region
    $region2: #{tpu_custom_call.1} parent=1 // pred_check
      _
    $region3: #{tpu_custom_call.1} parent=1 // pred_check_branch
      %13 = sbr.rel (0) target = $region5
    $region4: #{tpu_custom_call.1} parent=1 // pred_region
      %s15 = ssub.s32 8192, 8192
      %16 = vsyncadd [#allocation3], %s15
      %s17 = sshll.u32 [#allocation2], 4
      %s18 = int_to_ptr.vmem [resolvable:$true] %s17
      %23 = dma.hbm_to_vmem [thread:$0]  %s0, 8192, %s18, [#allocation3], 128, 128, 8
    $region5: #{tpu_custom_call.1} parent=1 // pred_fallthru
      _
    // Predicated region
    $region6: #{tpu_custom_call.1} parent=1 // pred_check
      _
    $region7: #{tpu_custom_call.1} parent=1 // pred_check_branch
      %25 = sbr.rel (0) target = $region9
    $region8: #{tpu_custom_call.1} parent=1 // pred_region
      %s27 = ssub.s32 2048, 2048
      %28 = vsyncadd [#allocation6], %s27
      %s29 = sshll.u32 [#allocation5], 4
      %s30 = int_to_ptr.vmem [resolvable:$true] %s29
      %35 = dma.hbm_to_vmem [thread:$0]  %s1, 2048, %s30, [#allocation6], 128, 128, 8
    $region9: #{tpu_custom_call.1} parent=1 // pred_fallthru
      _
    // Predicated region
    $region10: #{tpu_custom_call.1} parent=1 // pred_check
      _
    $region11: #{tpu_custom_call.1} parent=1 // pred_check_branch
      %37 = sbr.rel (0) target = $region13
    $region12: #{tpu_custom_call.1} parent=1 // pred_region
      _
    $region13: #{tpu_custom_call.1} parent=1 // pred_fallthru
      _
    // Predicated region
    $region14: #{tpu_custom_call.1} parent=1 // pred_check
      _
    $region15: #{tpu_custom_call.1} parent=1 // pred_check_branch
      %39 = sbr.rel (0) target = $region17
    $region16: #{tpu_custom_call.1} parent=1 // pred_region
      _
    $region17: #{tpu_custom_call.1} parent=1 // pred_fallthru
      _
    // Predicated region
    $region18: #{tpu_custom_call.1} parent=1 // pred_check
      _
    $region19: #{tpu_custom_call.1} parent=1 // pred_check_branch
      %41 = sbr.rel (0) target = $region21
    $region20: #{tpu_custom_call.1} parent=1 // pred_region
      %42 = dma.done [#allocation3], 8192
    $region21: #{tpu_custom_call.1} parent=1 // pred_fallthru
      _
    // Predicated region
    $region22: #{tpu_custom_call.1} parent=1 // pred_check
      _
    $region23: #{tpu_custom_call.1} parent=1 // pred_check_branch
      %44 = sbr.rel (0) target = $region25
    $region24: #{tpu_custom_call.1} parent=1 // pred_region
      %45 = dma.done [#allocation6], 2048
    $region25: #{tpu_custom_call.1} parent=1 // pred_fallthru
      _
    %v46 = vld [vmem:[#allocation5] sm:$0xff]
    %v47 = vld [vmem:[#allocation5 + $0x8] sm:$0xff]
    %v48 = vld [vmem:[#allocation5 + $0x10] sm:$0xff]
    %v49 = vld [vmem:[#allocation5 + $0x18] sm:$0xff]
    %v50 = vld [vmem:[#allocation5 + $0x20] sm:$0xff]
    %v51 = vld [vmem:[#allocation5 + $0x28] sm:$0xff]
    %v52 = vld [vmem:[#allocation5 + $0x30] sm:$0xff]
    %v53 = vld [vmem:[#allocation5 + $0x38] sm:$0xff]
    %v54 = vld [vmem:[#allocation5 + $0x40] sm:$0xff]
    %v55 = vld [vmem:[#allocation5 + $0x48] sm:$0xff]
    %v56 = vld [vmem:[#allocation5 + $0x50] sm:$0xff]
    %v57 = vld [vmem:[#allocation5 + $0x58] sm:$0xff]
    %v58 = vld [vmem:[#allocation5 + $0x60] sm:$0xff]
    %v59 = vld [vmem:[#allocation5 + $0x68] sm:$0xff]
    %v60 = vld [vmem:[#allocation5 + $0x70] sm:$0xff]
    %v61 = vld [vmem:[#allocation5 + $0x78] sm:$0xff]
    %v62 = vmul.f32 %v46, %v46
    %v63 = vmul.f32 %v47, %v47
    %v64 = vmul.f32 %v48, %v48
    %v65 = vmul.f32 %v49, %v49
    %v66 = vmul.f32 %v50, %v50
    %v67 = vmul.f32 %v51, %v51
    %v68 = vmul.f32 %v52, %v52
    %v69 = vmul.f32 %v53, %v53
    %v70 = vmul.f32 %v54, %v54
    %v71 = vmul.f32 %v55, %v55
    %v72 = vmul.f32 %v56, %v56
    %v73 = vmul.f32 %v57, %v57
    %v74 = vmul.f32 %v58, %v58
    %v75 = vmul.f32 %v59, %v59
    %v76 = vmul.f32 %v60, %v60
    %v77 = vmul.f32 %v61, %v61
    %v78 = vadd.f32 %v62, %v63
    %v79 = vadd.f32 %v78, %v64
    %v80 = vadd.f32 %v79, %v65
    %v81 = vadd.f32 %v80, %v66
    %v82 = vadd.f32 %v81, %v67
    %v83 = vadd.f32 %v82, %v68
    %v84 = vadd.f32 %v83, %v69
    %v85 = vadd.f32 %v84, %v70
    %v86 = vadd.f32 %v85, %v71
    %v87 = vadd.f32 %v86, %v72
    %v88 = vadd.f32 %v87, %v73
    %v89 = vadd.f32 %v88, %v74
    %v90 = vadd.f32 %v89, %v75
    %v91 = vadd.f32 %v90, %v76
    %v92 = vadd.f32 %v91, %v77
    %v93 = vrot.slane %v92, 4
    %v94 = vadd.f32 %v92, %v93
    %v95 = vrot.slane %v94, 2
    %v96 = vadd.f32 %v94, %v95
    %v97 = vrot.slane %v96, 1
    %v98 = vadd.f32 %v96, %v97
    %v99 = vrsqrt.pop %v98
    %v100 = vld [vmem:[%s2] sm:$0x1]
    %v101 = vmul.f32 %v100, %v99
    %v103 = vlaneseq
    %v104 = vshrl.u32 %v103, 7
    %v105 = vsub.s32 0, %v104
    %v106 = vrot.slane %v101, %v105
    %v108 = vmul.f32 %v46, %v106
    %v109 = vmul.f32 %v47, %v106
    %v110 = vmul.f32 %v48, %v106
    %v111 = vmul.f32 %v49, %v106
    %v112 = vmul.f32 %v50, %v106
    %v113 = vmul.f32 %v51, %v106
    %v114 = vmul.f32 %v52, %v106
    %v115 = vmul.f32 %v53, %v106
    %v116 = vmul.f32 %v54, %v106
    %v117 = vmul.f32 %v55, %v106
    %v118 = vmul.f32 %v56, %v106
    %v119 = vmul.f32 %v57, %v106
    %v120 = vmul.f32 %v58, %v106
    %v121 = vmul.f32 %v59, %v106
    %v122 = vmul.f32 %v60, %v106
    %v123 = vmul.f32 %v61, %v106
    %v124 = vld [vmem:[#allocation2] sm:$0xff]
    %v125 = vld [vmem:[#allocation2 + $0x8] sm:$0xff]
    %v126 = vld [vmem:[#allocation2 + $0x10] sm:$0xff]
    %v127 = vld [vmem:[#allocation2 + $0x18] sm:$0xff]
    %v128 = vld [vmem:[#allocation2 + $0x20] sm:$0xff]
    %v129 = vld [vmem:[#allocation2 + $0x28] sm:$0xff]
    %v130 = vld [vmem:[#allocation2 + $0x30] sm:$0xff]
    %v131 = vld [vmem:[#allocation2 + $0x38] sm:$0xff]
    %v132 = vld [vmem:[#allocation2 + $0x40] sm:$0xff]
    %v133 = vld [vmem:[#allocation2 + $0x48] sm:$0xff]
    %v134 = vld [vmem:[#allocation2 + $0x50] sm:$0xff]
    %v135 = vld [vmem:[#allocation2 + $0x58] sm:$0xff]
    %v136 = vld [vmem:[#allocation2 + $0x60] sm:$0xff]
    %v137 = vld [vmem:[#allocation2 + $0x68] sm:$0xff]
    %v138 = vld [vmem:[#allocation2 + $0x70] sm:$0xff]
    %v139 = vld [vmem:[#allocation2 + $0x78] sm:$0xff]
    %v140 = vld [vmem:[#allocation2 + $0x80] sm:$0xff]
    %v141 = vld [vmem:[#allocation2 + $0x88] sm:$0xff]
    %v142 = vld [vmem:[#allocation2 + $0x90] sm:$0xff]
    %v143 = vld [vmem:[#allocation2 + $0x98] sm:$0xff]
    %v144 = vld [vmem:[#allocation2 + $0xa0] sm:$0xff]
    %v145 = vld [vmem:[#allocation2 + $0xa8] sm:$0xff]
    %v146 = vld [vmem:[#allocation2 + $0xb0] sm:$0xff]
    %v147 = vld [vmem:[#allocation2 + $0xb8] sm:$0xff]
    %v148 = vld [vmem:[#allocation2 + $0xc0] sm:$0xff]
    %v149 = vld [vmem:[#allocation2 + $0xc8] sm:$0xff]
    %v150 = vld [vmem:[#allocation2 + $0xd0] sm:$0xff]
    %v151 = vld [vmem:[#allocation2 + $0xd8] sm:$0xff]
    %v152 = vld [vmem:[#allocation2 + $0xe0] sm:$0xff]
    %v153 = vld [vmem:[#allocation2 + $0xe8] sm:$0xff]
    %v154 = vld [vmem:[#allocation2 + $0xf0] sm:$0xff]
    %v155 = vld [vmem:[#allocation2 + $0xf8] sm:$0xff]
    %v156 = vld [vmem:[#allocation2 + $0x100] sm:$0xff]
    %v157 = vld [vmem:[#allocation2 + $0x108] sm:$0xff]
    %v158 = vld [vmem:[#allocation2 + $0x110] sm:$0xff]
    %v159 = vld [vmem:[#allocation2 + $0x118] sm:$0xff]
    %v160 = vld [vmem:[#allocation2 + $0x120] sm:$0xff]
    %v161 = vld [vmem:[#allocation2 + $0x128] sm:$0xff]
    %v162 = vld [vmem:[#allocation2 + $0x130] sm:$0xff]
    %v163 = vld [vmem:[#allocation2 + $0x138] sm:$0xff]
    %v164 = vld [vmem:[#allocation2 + $0x140] sm:$0xff]
    %v165 = vld [vmem:[#allocation2 + $0x148] sm:$0xff]
    %v166 = vld [vmem:[#allocation2 + $0x150] sm:$0xff]
    %v167 = vld [vmem:[#allocation2 + $0x158] sm:$0xff]
    %v168 = vld [vmem:[#allocation2 + $0x160] sm:$0xff]
    %v169 = vld [vmem:[#allocation2 + $0x168] sm:$0xff]
    %v170 = vld [vmem:[#allocation2 + $0x170] sm:$0xff]
    %v171 = vld [vmem:[#allocation2 + $0x178] sm:$0xff]
    %v172 = vld [vmem:[#allocation2 + $0x180] sm:$0xff]
    %v173 = vld [vmem:[#allocation2 + $0x188] sm:$0xff]
    %v174 = vld [vmem:[#allocation2 + $0x190] sm:$0xff]
    %v175 = vld [vmem:[#allocation2 + $0x198] sm:$0xff]
    %v176 = vld [vmem:[#allocation2 + $0x1a0] sm:$0xff]
    %v177 = vld [vmem:[#allocation2 + $0x1a8] sm:$0xff]
    %v178 = vld [vmem:[#allocation2 + $0x1b0] sm:$0xff]
    %v179 = vld [vmem:[#allocation2 + $0x1b8] sm:$0xff]
    %v180 = vld [vmem:[#allocation2 + $0x1c0] sm:$0xff]
    %v181 = vld [vmem:[#allocation2 + $0x1c8] sm:$0xff]
    %v182 = vld [vmem:[#allocation2 + $0x1d0] sm:$0xff]
    %v183 = vld [vmem:[#allocation2 + $0x1d8] sm:$0xff]
    %v184 = vld [vmem:[#allocation2 + $0x1e0] sm:$0xff]
    %v185 = vld [vmem:[#allocation2 + $0x1e8] sm:$0xff]
    %v186 = vld [vmem:[#allocation2 + $0x1f0] sm:$0xff]
    %v187 = vld [vmem:[#allocation2 + $0x1f8] sm:$0xff]
    %v188 = vld [vmem:[%s3] sm:$0x1]
    %v190 = vlaneseq
    %v191 = vshrl.u32 %v190, 7
    %v192 = vsub.s32 0, %v191
    %v193 = vrot.slane %v188, %v192
    %195 = vmatprep.subr.mxu0 0.0
    %196 = vmatpush1.msra.mxu0 %v123
    %197 = vmatprep.subr.mxu0 0.0
    %198 = vmatpush1.msra.mxu0 %v122
    %199 = vmatprep.subr.mxu0 0.0
    %200 = vmatpush1.msra.mxu0 %v121
    %201 = vmatprep.subr.mxu0 0.0
    %202 = vmatpush1.msra.mxu0 %v120
    %203 = vmatprep.subr.mxu0 0.0
    %204 = vmatpush1.msra.mxu0 %v119
    %205 = vmatprep.subr.mxu0 0.0
    %206 = vmatpush1.msra.mxu0 %v118
    %207 = vmatprep.subr.mxu0 0.0
    %208 = vmatpush1.msra.mxu0 %v117
    %209 = vmatprep.subr.mxu0 0.0
    %210 = vmatpush1.msra.mxu0 %v116
    %211 = vmatprep.subr.mxu0 0.0
    %212 = vmatpush1.msra.mxu0 %v115
    %213 = vmatprep.subr.mxu0 0.0
    %214 = vmatpush1.msra.mxu0 %v114
    %215 = vmatprep.subr.mxu0 0.0
    %216 = vmatpush1.msra.mxu0 %v113
    %217 = vmatprep.subr.mxu0 0.0
    %218 = vmatpush1.msra.mxu0 %v112
    %219 = vmatprep.subr.mxu0 0.0
    %220 = vmatpush1.msra.mxu0 %v111
    %221 = vmatprep.subr.mxu0 0.0
    %222 = vmatpush1.msra.mxu0 %v110
    %223 = vmatprep.subr.mxu0 0.0
    %224 = vmatpush1.msra.mxu0 %v109
    %225 = vmatprep.subr.mxu0 0.0
    %226 = vmatpush1.msra.mxu0 %v108
    %227 = vmatprep.subr.mxu0 0.0
    %228 = vmatpush2.msra.mxu0 0.0
    %229 = vmatprep.subr.mxu0 0.0
    %230 = vmatpush2.msra.mxu0 0.0
    %231 = vmatprep.subr.mxu0 0.0
    %232 = vmatpush2.msra.mxu0 0.0
    %233 = vmatprep.subr.mxu0 0.0
    %234 = vmatpush2.msra.mxu0 0.0
    %235 = vmatprep.subr.mxu0 0.0
    %236 = vmatpush2.msra.mxu0 0.0
    %237 = vmatprep.subr.mxu0 0.0
    %238 = vmatpush2.msra.mxu0 0.0
    %239 = vmatprep.subr.mxu0 0.0
    %240 = vmatpush2.msra.mxu0 0.0
    %241 = vmatprep.subr.mxu0 0.0
    %242 = vmatpush2.msra.mxu0 0.0
    %243 = vmatprep.subr.mxu0 0.0
    %244 = vmatpush2.msra.mxu0 0.0
    %245 = vmatprep.subr.mxu0 0.0
    %246 = vmatpush2.msra.mxu0 0.0
    %247 = vmatprep.subr.mxu0 0.0
    %248 = vmatpush2.msra.mxu0 0.0
    %249 = vmatprep.subr.mxu0 0.0
    %250 = vmatpush2.msra.mxu0 0.0
    %251 = vmatprep.subr.mxu0 0.0
    %252 = vmatpush2.msra.mxu0 0.0
    %253 = vmatprep.subr.mxu0 0.0
    %254 = vmatpush2.msra.mxu0 0.0
    %255 = vmatprep.subr.mxu0 0.0
    %256 = vmatpush2.msra.mxu0 0.0
    %257 = vmatprep.subr.mxu0 0.0
    %258 = vmatpush2.msra.mxu0 0.0
    %259 = vmatprep.mubr.f32.mxu0 0.0
    %260 = vmatmul.mubr.f32.gmra.mxu0 %v124
    %v261 = vpop.f32.mrf.mxu0
    %v262 = vadd.f32 %v193, %v261
    %v263 = vpop.f32.mrf.mxu0
    %264 = vmatprep.mubr.f32.mxu0 0.0
    %265 = vmatmul.mubr.f32.gmra.mxu0 %v125
    %v266 = vpop.f32.mrf.mxu0
    %v267 = vadd.f32 %v193, %v266
    %v268 = vpop.f32.mrf.mxu0
    %269 = vmatprep.mubr.f32.mxu0 0.0
    %270 = vmatmul.mubr.f32.gmra.mxu0 %v126
    %v271 = vpop.f32.mrf.mxu0
    %v272 = vadd.f32 %v193, %v271
    %v273 = vpop.f32.mrf.mxu0
    %274 = vmatprep.mubr.f32.mxu0 0.0
    %275 = vmatmul.mubr.f32.gmra.mxu0 %v127
    %v276 = vpop.f32.mrf.mxu0
    %v277 = vadd.f32 %v193, %v276
    %v278 = vpop.f32.mrf.mxu0
    %279 = vmatprep.mubr.f32.mxu0 0.0
    %280 = vmatmul.mubr.f32.gmra.mxu0 %v128
    %v281 = vpop.f32.mrf.mxu0
    %v282 = vadd.f32 %v193, %v281
    %v283 = vpop.f32.mrf.mxu0
    %284 = vmatprep.mubr.f32.mxu0 0.0
    %285 = vmatmul.mubr.f32.gmra.mxu0 %v129
    %v286 = vpop.f32.mrf.mxu0
    %v287 = vadd.f32 %v193, %v286
    %v288 = vpop.f32.mrf.mxu0
    %289 = vmatprep.mubr.f32.mxu0 0.0
    %290 = vmatmul.mubr.f32.gmra.mxu0 %v130
    %v291 = vpop.f32.mrf.mxu0
    %v292 = vadd.f32 %v193, %v291
    %v293 = vpop.f32.mrf.mxu0
    %294 = vmatprep.mubr.f32.mxu0 0.0
    %295 = vmatmul.mubr.f32.gmra.mxu0 %v131
    %v296 = vpop.f32.mrf.mxu0
    %v297 = vadd.f32 %v193, %v296
    %v298 = vpop.f32.mrf.mxu0
    %299 = vmatprep.mubr.f32.mxu0 0.0
    %300 = vmatmul.mubr.f32.gmra.mxu0 %v132
    %v301 = vpop.f32.mrf.mxu0
    %v302 = vadd.f32 %v193, %v301
    %v303 = vpop.f32.mrf.mxu0
    %304 = vmatprep.mubr.f32.mxu0 0.0
    %305 = vmatmul.mubr.f32.gmra.mxu0 %v133
    %v306 = vpop.f32.mrf.mxu0
    %v307 = vadd.f32 %v193, %v306
    %v308 = vpop.f32.mrf.mxu0
    %309 = vmatprep.mubr.f32.mxu0 0.0
    %310 = vmatmul.mubr.f32.gmra.mxu0 %v134
    %v311 = vpop.f32.mrf.mxu0
    %v312 = vadd.f32 %v193, %v311
    %v313 = vpop.f32.mrf.mxu0
    %314 = vmatprep.mubr.f32.mxu0 0.0
    %315 = vmatmul.mubr.f32.gmra.mxu0 %v135
    %v316 = vpop.f32.mrf.mxu0
    %v317 = vadd.f32 %v193, %v316
    %v318 = vpop.f32.mrf.mxu0
    %319 = vmatprep.mubr.f32.mxu0 0.0
    %320 = vmatmul.mubr.f32.gmra.mxu0 %v136
    %v321 = vpop.f32.mrf.mxu0
    %v322 = vadd.f32 %v193, %v321
    %v323 = vpop.f32.mrf.mxu0
    %324 = vmatprep.mubr.f32.mxu0 0.0
    %325 = vmatmul.mubr.f32.gmra.mxu0 %v137
    %v326 = vpop.f32.mrf.mxu0
    %v327 = vadd.f32 %v193, %v326
    %v328 = vpop.f32.mrf.mxu0
    %329 = vmatprep.mubr.f32.mxu0 0.0
    %330 = vmatmul.mubr.f32.gmra.mxu0 %v138
    %v331 = vpop.f32.mrf.mxu0
    %v332 = vadd.f32 %v193, %v331
    %v333 = vpop.f32.mrf.mxu0
    %334 = vmatprep.mubr.f32.mxu0 0.0
    %335 = vmatmul.mubr.f32.gmra.mxu0 %v139
    %v336 = vpop.f32.mrf.mxu0
    %v337 = vadd.f32 %v193, %v336
    %v338 = vpop.f32.mrf.mxu0
    %339 = vmatprep.mubr.f32.mxu0 0.0
    %340 = vmatmul.mubr.f32.gmra.mxu0 %v140
    %v341 = vpop.f32.mrf.mxu0
    %v342 = vadd.f32 %v193, %v341
    %v343 = vpop.f32.mrf.mxu0
    %344 = vmatprep.mubr.f32.mxu0 0.0
    %345 = vmatmul.mubr.f32.gmra.mxu0 %v141
    %v346 = vpop.f32.mrf.mxu0
    %v347 = vadd.f32 %v193, %v346
    %v348 = vpop.f32.mrf.mxu0
    %349 = vmatprep.mubr.f32.mxu0 0.0
    %350 = vmatmul.mubr.f32.gmra.mxu0 %v142
    %v351 = vpop.f32.mrf.mxu0
    %v352 = vadd.f32 %v193, %v351
    %v353 = vpop.f32.mrf.mxu0
    %354 = vmatprep.mubr.f32.mxu0 0.0
    %355 = vmatmul.mubr.f32.gmra.mxu0 %v143
    %v356 = vpop.f32.mrf.mxu0
    %v357 = vadd.f32 %v193, %v356
    %v358 = vpop.f32.mrf.mxu0
    %359 = vmatprep.mubr.f32.mxu0 0.0
    %360 = vmatmul.mubr.f32.gmra.mxu0 %v144
    %v361 = vpop.f32.mrf.mxu0
    %v362 = vadd.f32 %v193, %v361
    %v363 = vpop.f32.mrf.mxu0
    %364 = vmatprep.mubr.f32.mxu0 0.0
    %365 = vmatmul.mubr.f32.gmra.mxu0 %v145
    %v366 = vpop.f32.mrf.mxu0
    %v367 = vadd.f32 %v193, %v366
    %v368 = vpop.f32.mrf.mxu0
    %369 = vmatprep.mubr.f32.mxu0 0.0
    %370 = vmatmul.mubr.f32.gmra.mxu0 %v146
    %v371 = vpop.f32.mrf.mxu0
    %v372 = vadd.f32 %v193, %v371
    %v373 = vpop.f32.mrf.mxu0
    %374 = vmatprep.mubr.f32.mxu0 0.0
    %375 = vmatmul.mubr.f32.gmra.mxu0 %v147
    %v376 = vpop.f32.mrf.mxu0
    %v377 = vadd.f32 %v193, %v376
    %v378 = vpop.f32.mrf.mxu0
    %379 = vmatprep.mubr.f32.mxu0 0.0
    %380 = vmatmul.mubr.f32.gmra.mxu0 %v148
    %v381 = vpop.f32.mrf.mxu0
    %v382 = vadd.f32 %v193, %v381
    %v383 = vpop.f32.mrf.mxu0
    %384 = vmatprep.mubr.f32.mxu0 0.0
    %385 = vmatmul.mubr.f32.gmra.mxu0 %v149
    %v386 = vpop.f32.mrf.mxu0
    %v387 = vadd.f32 %v193, %v386
    %v388 = vpop.f32.mrf.mxu0
    %389 = vmatprep.mubr.f32.mxu0 0.0
    %390 = vmatmul.mubr.f32.gmra.mxu0 %v150
    %v391 = vpop.f32.mrf.mxu0
    %v392 = vadd.f32 %v193, %v391
    %v393 = vpop.f32.mrf.mxu0
    %394 = vmatprep.mubr.f32.mxu0 0.0
    %395 = vmatmul.mubr.f32.gmra.mxu0 %v151
    %v396 = vpop.f32.mrf.mxu0
    %v397 = vadd.f32 %v193, %v396
    %v398 = vpop.f32.mrf.mxu0
    %399 = vmatprep.mubr.f32.mxu0 0.0
    %400 = vmatmul.mubr.f32.gmra.mxu0 %v152
    %v401 = vpop.f32.mrf.mxu0
    %v402 = vadd.f32 %v193, %v401
    %v403 = vpop.f32.mrf.mxu0
    %404 = vmatprep.mubr.f32.mxu0 0.0
    %405 = vmatmul.mubr.f32.gmra.mxu0 %v153
    %v406 = vpop.f32.mrf.mxu0
    %v407 = vadd.f32 %v193, %v406
    %v408 = vpop.f32.mrf.mxu0
    %409 = vmatprep.mubr.f32.mxu0 0.0
    %410 = vmatmul.mubr.f32.gmra.mxu0 %v154
    %v411 = vpop.f32.mrf.mxu0
    %v412 = vadd.f32 %v193, %v411
    %v413 = vpop.f32.mrf.mxu0
    %414 = vmatprep.mubr.f32.mxu0 0.0
    %415 = vmatmul.mubr.f32.gmra.mxu0 %v155
    %v416 = vpop.f32.mrf.mxu0
    %v417 = vadd.f32 %v193, %v416
    %v418 = vpop.f32.mrf.mxu0
    %419 = vmatprep.mubr.f32.mxu0 0.0
    %420 = vmatmul.mubr.f32.gmra.mxu0 %v156
    %v421 = vpop.f32.mrf.mxu0
    %v422 = vadd.f32 %v193, %v421
    %v423 = vpop.f32.mrf.mxu0
    %424 = vmatprep.mubr.f32.mxu0 0.0
    %425 = vmatmul.mubr.f32.gmra.mxu0 %v157
    %v426 = vpop.f32.mrf.mxu0
    %v427 = vadd.f32 %v193, %v426
    %v428 = vpop.f32.mrf.mxu0
    %429 = vmatprep.mubr.f32.mxu0 0.0
    %430 = vmatmul.mubr.f32.gmra.mxu0 %v158
    %v431 = vpop.f32.mrf.mxu0
    %v432 = vadd.f32 %v193, %v431
    %v433 = vpop.f32.mrf.mxu0
    %434 = vmatprep.mubr.f32.mxu0 0.0
    %435 = vmatmul.mubr.f32.gmra.mxu0 %v159
    %v436 = vpop.f32.mrf.mxu0
    %v437 = vadd.f32 %v193, %v436
    %v438 = vpop.f32.mrf.mxu0
    %439 = vmatprep.mubr.f32.mxu0 0.0
    %440 = vmatmul.mubr.f32.gmra.mxu0 %v160
    %v441 = vpop.f32.mrf.mxu0
    %v442 = vadd.f32 %v193, %v441
    %v443 = vpop.f32.mrf.mxu0
    %444 = vmatprep.mubr.f32.mxu0 0.0
    %445 = vmatmul.mubr.f32.gmra.mxu0 %v161
    %v446 = vpop.f32.mrf.mxu0
    %v447 = vadd.f32 %v193, %v446
    %v448 = vpop.f32.mrf.mxu0
    %449 = vmatprep.mubr.f32.mxu0 0.0
    %450 = vmatmul.mubr.f32.gmra.mxu0 %v162
    %v451 = vpop.f32.mrf.mxu0
    %v452 = vadd.f32 %v193, %v451
    %v453 = vpop.f32.mrf.mxu0
    %454 = vmatprep.mubr.f32.mxu0 0.0
    %455 = vmatmul.mubr.f32.gmra.mxu0 %v163
    %v456 = vpop.f32.mrf.mxu0
    %v457 = vadd.f32 %v193, %v456
    %v458 = vpop.f32.mrf.mxu0
    %459 = vmatprep.mubr.f32.mxu0 0.0
    %460 = vmatmul.mubr.f32.gmra.mxu0 %v164
    %v461 = vpop.f32.mrf.mxu0
    %v462 = vadd.f32 %v193, %v461
    %v463 = vpop.f32.mrf.mxu0
    %464 = vmatprep.mubr.f32.mxu0 0.0
    %465 = vmatmul.mubr.f32.gmra.mxu0 %v165
    %v466 = vpop.f32.mrf.mxu0
    %v467 = vadd.f32 %v193, %v466
    %v468 = vpop.f32.mrf.mxu0
    %469 = vmatprep.mubr.f32.mxu0 0.0
    %470 = vmatmul.mubr.f32.gmra.mxu0 %v166
    %v471 = vpop.f32.mrf.mxu0
    %v472 = vadd.f32 %v193, %v471
    %v473 = vpop.f32.mrf.mxu0
    %474 = vmatprep.mubr.f32.mxu0 0.0
    %475 = vmatmul.mubr.f32.gmra.mxu0 %v167
    %v476 = vpop.f32.mrf.mxu0
    %v477 = vadd.f32 %v193, %v476
    %v478 = vpop.f32.mrf.mxu0
    %479 = vmatprep.mubr.f32.mxu0 0.0
    %480 = vmatmul.mubr.f32.gmra.mxu0 %v168
    %v481 = vpop.f32.mrf.mxu0
    %v482 = vadd.f32 %v193, %v481
    %v483 = vpop.f32.mrf.mxu0
    %484 = vmatprep.mubr.f32.mxu0 0.0
    %485 = vmatmul.mubr.f32.gmra.mxu0 %v169
    %v486 = vpop.f32.mrf.mxu0
    %v487 = vadd.f32 %v193, %v486
    %v488 = vpop.f32.mrf.mxu0
    %489 = vmatprep.mubr.f32.mxu0 0.0
    %490 = vmatmul.mubr.f32.gmra.mxu0 %v170
    %v491 = vpop.f32.mrf.mxu0
    %v492 = vadd.f32 %v193, %v491
    %v493 = vpop.f32.mrf.mxu0
    %494 = vmatprep.mubr.f32.mxu0 0.0
    %495 = vmatmul.mubr.f32.gmra.mxu0 %v171
    %v496 = vpop.f32.mrf.mxu0
    %v497 = vadd.f32 %v193, %v496
    %v498 = vpop.f32.mrf.mxu0
    %499 = vmatprep.mubr.f32.mxu0 0.0
    %500 = vmatmul.mubr.f32.gmra.mxu0 %v172
    %v501 = vpop.f32.mrf.mxu0
    %v502 = vadd.f32 %v193, %v501
    %v503 = vpop.f32.mrf.mxu0
    %504 = vmatprep.mubr.f32.mxu0 0.0
    %505 = vmatmul.mubr.f32.gmra.mxu0 %v173
    %v506 = vpop.f32.mrf.mxu0
    %v507 = vadd.f32 %v193, %v506
    %v508 = vpop.f32.mrf.mxu0
    %509 = vmatprep.mubr.f32.mxu0 0.0
    %510 = vmatmul.mubr.f32.gmra.mxu0 %v174
    %v511 = vpop.f32.mrf.mxu0
    %v512 = vadd.f32 %v193, %v511
    %v513 = vpop.f32.mrf.mxu0
    %514 = vmatprep.mubr.f32.mxu0 0.0
    %515 = vmatmul.mubr.f32.gmra.mxu0 %v175
    %v516 = vpop.f32.mrf.mxu0
    %v517 = vadd.f32 %v193, %v516
    %v518 = vpop.f32.mrf.mxu0
    %519 = vmatprep.mubr.f32.mxu0 0.0
    %520 = vmatmul.mubr.f32.gmra.mxu0 %v176
    %v521 = vpop.f32.mrf.mxu0
    %v522 = vadd.f32 %v193, %v521
    %v523 = vpop.f32.mrf.mxu0
    %524 = vmatprep.mubr.f32.mxu0 0.0
    %525 = vmatmul.mubr.f32.gmra.mxu0 %v177
    %v526 = vpop.f32.mrf.mxu0
    %v527 = vadd.f32 %v193, %v526
    %v528 = vpop.f32.mrf.mxu0
    %529 = vmatprep.mubr.f32.mxu0 0.0
    %530 = vmatmul.mubr.f32.gmra.mxu0 %v178
    %v531 = vpop.f32.mrf.mxu0
    %v532 = vadd.f32 %v193, %v531
    %v533 = vpop.f32.mrf.mxu0
    %534 = vmatprep.mubr.f32.mxu0 0.0
    %535 = vmatmul.mubr.f32.gmra.mxu0 %v179
    %v536 = vpop.f32.mrf.mxu0
    %v537 = vadd.f32 %v193, %v536
    %v538 = vpop.f32.mrf.mxu0
    %539 = vmatprep.mubr.f32.mxu0 0.0
    %540 = vmatmul.mubr.f32.gmra.mxu0 %v180
    %v541 = vpop.f32.mrf.mxu0
    %v542 = vadd.f32 %v193, %v541
    %v543 = vpop.f32.mrf.mxu0
    %544 = vmatprep.mubr.f32.mxu0 0.0
    %545 = vmatmul.mubr.f32.gmra.mxu0 %v181
    %v546 = vpop.f32.mrf.mxu0
    %v547 = vadd.f32 %v193, %v546
    %v548 = vpop.f32.mrf.mxu0
    %549 = vmatprep.mubr.f32.mxu0 0.0
    %550 = vmatmul.mubr.f32.gmra.mxu0 %v182
    %v551 = vpop.f32.mrf.mxu0
    %v552 = vadd.f32 %v193, %v551
    %v553 = vpop.f32.mrf.mxu0
    %554 = vmatprep.mubr.f32.mxu0 0.0
    %555 = vmatmul.mubr.f32.gmra.mxu0 %v183
    %v556 = vpop.f32.mrf.mxu0
    %v557 = vadd.f32 %v193, %v556
    %v558 = vpop.f32.mrf.mxu0
    %559 = vmatprep.mubr.f32.mxu0 0.0
    %560 = vmatmul.mubr.f32.gmra.mxu0 %v184
    %v561 = vpop.f32.mrf.mxu0
    %v562 = vadd.f32 %v193, %v561
    %v563 = vpop.f32.mrf.mxu0
    %564 = vmatprep.mubr.f32.mxu0 0.0
    %565 = vmatmul.mubr.f32.gmra.mxu0 %v185
    %v566 = vpop.f32.mrf.mxu0
    %v567 = vadd.f32 %v193, %v566
    %v568 = vpop.f32.mrf.mxu0
    %569 = vmatprep.mubr.f32.mxu0 0.0
    %570 = vmatmul.mubr.f32.gmra.mxu0 %v186
    %v571 = vpop.f32.mrf.mxu0
    %v572 = vadd.f32 %v193, %v571
    %v573 = vpop.f32.mrf.mxu0
    %574 = vmatprep.mubr.f32.mxu0 0.0
    %575 = vmatmul.mubr.f32.gmra.mxu0 %v187
    %v576 = vpop.f32.mrf.mxu0
    %v577 = vadd.f32 %v193, %v576
    %v578 = vpop.f32.mrf.mxu0
    %579 = vdwg.mxu0
    %580 = vst [vmem:[#allocation7] sm:$0xff] %v262
    %581 = vst [vmem:[#allocation7 + $0x8] sm:$0xff] %v267
    %582 = vst [vmem:[#allocation7 + $0x10] sm:$0xff] %v272
    %583 = vst [vmem:[#allocation7 + $0x18] sm:$0xff] %v277
    %584 = vst [vmem:[#allocation7 + $0x20] sm:$0xff] %v282
    %585 = vst [vmem:[#allocation7 + $0x28] sm:$0xff] %v287
    %586 = vst [vmem:[#allocation7 + $0x30] sm:$0xff] %v292
    %587 = vst [vmem:[#allocation7 + $0x38] sm:$0xff] %v297
    %588 = vst [vmem:[#allocation7 + $0x40] sm:$0xff] %v302
    %589 = vst [vmem:[#allocation7 + $0x48] sm:$0xff] %v307
    %590 = vst [vmem:[#allocation7 + $0x50] sm:$0xff] %v312
    %591 = vst [vmem:[#allocation7 + $0x58] sm:$0xff] %v317
    %592 = vst [vmem:[#allocation7 + $0x60] sm:$0xff] %v322
    %593 = vst [vmem:[#allocation7 + $0x68] sm:$0xff] %v327
    %594 = vst [vmem:[#allocation7 + $0x70] sm:$0xff] %v332
    %595 = vst [vmem:[#allocation7 + $0x78] sm:$0xff] %v337
    %596 = vst [vmem:[#allocation7 + $0x80] sm:$0xff] %v342
    %597 = vst [vmem:[#allocation7 + $0x88] sm:$0xff] %v347
    %598 = vst [vmem:[#allocation7 + $0x90] sm:$0xff] %v352
    %599 = vst [vmem:[#allocation7 + $0x98] sm:$0xff] %v357
    %600 = vst [vmem:[#allocation7 + $0xa0] sm:$0xff] %v362
    %601 = vst [vmem:[#allocation7 + $0xa8] sm:$0xff] %v367
    %602 = vst [vmem:[#allocation7 + $0xb0] sm:$0xff] %v372
    %603 = vst [vmem:[#allocation7 + $0xb8] sm:$0xff] %v377
    %604 = vst [vmem:[#allocation7 + $0xc0] sm:$0xff] %v382
    %605 = vst [vmem:[#allocation7 + $0xc8] sm:$0xff] %v387
    %606 = vst [vmem:[#allocation7 + $0xd0] sm:$0xff] %v392
    %607 = vst [vmem:[#allocation7 + $0xd8] sm:$0xff] %v397
    %608 = vst [vmem:[#allocation7 + $0xe0] sm:$0xff] %v402
    %609 = vst [vmem:[#allocation7 + $0xe8] sm:$0xff] %v407
    %610 = vst [vmem:[#allocation7 + $0xf0] sm:$0xff] %v412
    %611 = vst [vmem:[#allocation7 + $0xf8] sm:$0xff] %v417
    %612 = vst [vmem:[#allocation7 + $0x100] sm:$0xff] %v422
    %613 = vst [vmem:[#allocation7 + $0x108] sm:$0xff] %v427
    %614 = vst [vmem:[#allocation7 + $0x110] sm:$0xff] %v432
    %615 = vst [vmem:[#allocation7 + $0x118] sm:$0xff] %v437
    %616 = vst [vmem:[#allocation7 + $0x120] sm:$0xff] %v442
    %617 = vst [vmem:[#allocation7 + $0x128] sm:$0xff] %v447
    %618 = vst [vmem:[#allocation7 + $0x130] sm:$0xff] %v452
    %619 = vst [vmem:[#allocation7 + $0x138] sm:$0xff] %v457
    %620 = vst [vmem:[#allocation7 + $0x140] sm:$0xff] %v462
    %621 = vst [vmem:[#allocation7 + $0x148] sm:$0xff] %v467
    %622 = vst [vmem:[#allocation7 + $0x150] sm:$0xff] %v472
    %623 = vst [vmem:[#allocation7 + $0x158] sm:$0xff] %v477
    %624 = vst [vmem:[#allocation7 + $0x160] sm:$0xff] %v482
    %625 = vst [vmem:[#allocation7 + $0x168] sm:$0xff] %v487
    %626 = vst [vmem:[#allocation7 + $0x170] sm:$0xff] %v492
    %627 = vst [vmem:[#allocation7 + $0x178] sm:$0xff] %v497
    %628 = vst [vmem:[#allocation7 + $0x180] sm:$0xff] %v502
    %629 = vst [vmem:[#allocation7 + $0x188] sm:$0xff] %v507
    %630 = vst [vmem:[#allocation7 + $0x190] sm:$0xff] %v512
    %631 = vst [vmem:[#allocation7 + $0x198] sm:$0xff] %v517
    %632 = vst [vmem:[#allocation7 + $0x1a0] sm:$0xff] %v522
    %633 = vst [vmem:[#allocation7 + $0x1a8] sm:$0xff] %v527
    %634 = vst [vmem:[#allocation7 + $0x1b0] sm:$0xff] %v532
    %635 = vst [vmem:[#allocation7 + $0x1b8] sm:$0xff] %v537
    %636 = vst [vmem:[#allocation7 + $0x1c0] sm:$0xff] %v542
    %637 = vst [vmem:[#allocation7 + $0x1c8] sm:$0xff] %v547
    %638 = vst [vmem:[#allocation7 + $0x1d0] sm:$0xff] %v552
    %639 = vst [vmem:[#allocation7 + $0x1d8] sm:$0xff] %v557
    %640 = vst [vmem:[#allocation7 + $0x1e0] sm:$0xff] %v562
    %641 = vst [vmem:[#allocation7 + $0x1e8] sm:$0xff] %v567
    %642 = vst [vmem:[#allocation7 + $0x1f0] sm:$0xff] %v572
    %643 = vst [vmem:[#allocation7 + $0x1f8] sm:$0xff] %v577
    // Predicated region
    $region26: #{tpu_custom_call.1} parent=1 // pred_check
      _
    $region27: #{tpu_custom_call.1} parent=1 // pred_check_branch
      %645 = sbr.rel (0) target = $region29
    $region28: #{tpu_custom_call.1} parent=1 // pred_region
      %s647 = ssub.s32 8192, 8192
      %648 = vsyncadd [#allocation4], %s647
      %s649 = sshll.u32 [#allocation7], 4
      %s650 = int_to_ptr.vmem [resolvable:$true] %s649
      %655 = dma.vmem_to_hbm [thread:$0]  %s650, 8192, %s4, [#allocation4], 128, 128, 8
    $region29: #{tpu_custom_call.1} parent=1 // pred_fallthru
      _
    // Predicated region
    $region30: #{tpu_custom_call.1} parent=1 // pred_check
      _
    $region31: #{tpu_custom_call.1} parent=1 // pred_check_branch
      %657 = sbr.rel (0) target = $region33
    $region32: #{tpu_custom_call.1} parent=1 // pred_region
      %658 = dma.done [#allocation4], 8192
    $region33: #{tpu_custom_call.1} parent=1 // pred_fallthru
      _
    %659 = vsyncpa [#allocation3], 1
    %660 = vsyncpa [#allocation6], 1
    %661 = vsyncpa [#allocation4], 1

</llo_original>
